<compile_context>
chip_gen: v7x
topology: tpu7x:2x2x1
jax: 0.10.0
libtpu: 0.0.40
codegen_flags: <defaults>
</compile_context>

<pallas_src>
import jax
import jax.numpy as jnp
from jax.experimental import pallas as pl
from jax.experimental.pallas import tpu as pltpu


def _vmem_step_budget_bytes():
    # Bytes of (input + output) tile moved per grid step.  Pallas double-buffers both, so
    # 2x this (plus small W/b + in-kernel temporaries) must fit under the scoped-VMEM
    # default on every generation (16 MiB v5e, 32 MiB v6e/v7x; v7x has only 64 MiB total).
    # Clamp to [2 MiB, 4 MiB]: ~10 MiB peak VMEM -> safe everywhere, >=10x the old 384 KiB step.
    try:
        cap = pltpu.get_tpu_info().vmem_capacity_bytes
    except Exception:  # conservative (v7x-sized) fallback
        cap = 64 << 20
    return max(2 << 20, min(4 << 20, cap // 16))


@jax.jit
def linear_mapping_layer(x, weight, bias):
    """Equivalent of nn.Conv3d(C_in, C_out, kernel_size=1)(x).

    x      : [N, C_in, D, H, W]
    weight : [C_out, C_in, 1, 1, 1]   (PyTorch Conv3d weight layout)
    bias   : [C_out]
    returns: [N, C_out, D, H, W]
    """
    n, c_in, d, h, w = x.shape
    c_out = weight.shape[0]
    s = d * h * w
    out_dtype = x.dtype
    dtype_bytes = jnp.dtype(x.dtype).itemsize

    w_mat = weight.reshape(c_out, c_in).astype(jnp.float32)
    b_vec = bias.reshape(c_out).astype(jnp.float32)

    step_budget = _vmem_step_budget_bytes()
    # Spatial positions per grid step (each position moves c_in + c_out elements).
    elems_budget = max(128, step_budget // ((c_in + c_out) * dtype_bytes))

    cost = pl.CostEstimate(
        flops=2 * n * s * c_in * c_out + n * s * c_out,
        transcendentals=0,
        bytes_accessed=(c_in + c_out) * n * s * dtype_bytes + (c_out * c_in + c_out) * 4,
    )
    cparams = pltpu.CompilerParams(dimension_semantics=("parallel", "parallel"))

    # Tiny channel counts -> unrolled VPU accumulation (no MXU K-padding).  Large channel
    # counts -> MXU matmul (unrolling would blow up trace size and MXU padding is minor).
    use_vpu = (c_in * c_out) <= 256

    if use_vpu:
        smem_spec = pl.BlockSpec(memory_space=pltpu.MemorySpace.SMEM)

        def vpu_kernel(x_ref, w_ref, b_ref, o_ref):
            # x_ref: (b_tile, C_in, *spatial)   o_ref: (b_tile, C_out, *spatial)
            # w_ref (C_out, C_in) / b_ref (C_out,) live in SMEM: cheap scalar reads that
            # broadcast into VPU FMAs.  Compute stays hidden under the HBM DMA.
            xs = [x_ref[:, c].astype(jnp.float32) for c in range(c_in)]
            for o in range(c_out):
                acc = xs[0] * w_ref[o, 0]
                for c in range(1, c_in):
                    acc = acc + xs[c] * w_ref[o, c]
                o_ref[:, o] = (acc + b_ref[o]).astype(o_ref.dtype)

        if s % 128 == 0:
            # Sublane+lane dense layout: view spatial as (S/128, 128) so the last two block
            # dims fill (8,128) VMEM tiles even with only 4 input channels.
            s128 = s // 128
            if s <= elems_budget:
                # Small per-batch spatial extent: block the batch axis so each grid step
                # still moves a multi-MiB working set (amortizes ~0.35 us/step overhead).
                b_tile = max(1, min(n, elems_budget // s))
                s_sub = s128
            else:
                b_tile = 1
                s_sub = max(1, elems_budget // 128)
                if s128 >= 8:
                    s_sub = max(8, (s_sub // 8) * 8)
                s_sub = min(s_sub, s128)
            grid = (pl.cdiv(n, b_tile), pl.cdiv(s128, s_sub))
            x_view = x.reshape(n, c_in, s128, 128)  # metadata-only
            out_view = pl.pallas_call(
                vpu_kernel,
                out_shape=jax.ShapeDtypeStruct((n, c_out, s128, 128), out_dtype),
                grid_spec=pltpu.PrefetchScalarGridSpec(
                    num_scalar_prefetch=0,
                    grid=grid,
                    in_specs=[
                        pl.BlockSpec((b_tile, c_in, s_sub, 128),
                                     lambda bi, si: (bi, 0, si, 0)),
                        smem_spec,  # weights
                        smem_spec,  # bias
                    ],
                    out_specs=pl.BlockSpec((b_tile, c_out, s_sub, 128),
                                           lambda bi, si: (bi, 0, si, 0)),
                ),
                compiler_params=cparams,
                cost_estimate=cost,
            )(x_view, w_mat, b_vec)
            return out_view.reshape(n, c_out, d, h, w)

        # General fallback (S not a multiple of 128): lane axis = flattened spatial dim.
        # Ragged last block (if any) is masked by Pallas -- no jnp.pad, no output slice.
        if s <= elems_budget:
            b_tile = max(1, min(n, elems_budget // s))
            s_tile = s
        else:
            b_tile = 1
            s_tile = max(128, (elems_budget // 128) * 128)
        grid = (pl.cdiv(n, b_tile), pl.cdiv(s, s_tile))
        x_view = x.reshape(n, c_in, s)
        out_view = pl.pallas_call(
            vpu_kernel,
            out_shape=jax.ShapeDtypeStruct((n, c_out, s), out_dtype),
            grid_spec=pltpu.PrefetchScalarGridSpec(
                num_scalar_prefetch=0,
                grid=grid,
                in_specs=[
                    pl.BlockSpec((b_tile, c_in, s_tile), lambda bi, si: (bi, 0, si)),
                    smem_spec,
                    smem_spec,
                ],
                out_specs=pl.BlockSpec((b_tile, c_out, s_tile),
                                       lambda bi, si: (bi, 0, si)),
            ),
            compiler_params=cparams,
            cost_estimate=cost,
        )(x_view, w_mat, b_vec)
        return out_view.reshape(n, c_out, d, h, w)

    # ---- MXU path (large channel counts): per-batch W @ x[n] over lane-dense spatial tiles.
    def mxu_kernel(x_ref, w_ref, b_ref, o_ref):
        acc = jnp.dot(w_ref[...], x_ref[0], preferred_element_type=jnp.float32)
        o_ref[0] = (acc + b_ref[...]).astype(o_ref.dtype)

    s_tile = s if s <= elems_budget else max(128, (elems_budget // 128) * 128)
    grid = (n, pl.cdiv(s, s_tile))
    x_view = x.reshape(n, c_in, s)
    out_view = pl.pallas_call(
        mxu_kernel,
        out_shape=jax.ShapeDtypeStruct((n, c_out, s), out_dtype),
        grid_spec=pltpu.PrefetchScalarGridSpec(
            num_scalar_prefetch=0,
            grid=grid,
            in_specs=[
                pl.BlockSpec((1, c_in, s_tile), lambda bi, si: (bi, 0, si)),
                pl.BlockSpec((c_out, c_in), lambda bi, si: (0, 0)),   # VMEM-resident W
                pl.BlockSpec((c_out, 1), lambda bi, si: (0, 0)),      # VMEM-resident b
            ],
            out_specs=pl.BlockSpec((1, c_out, s_tile), lambda bi, si: (bi, 0, si)),
        ),
        compiler_params=cparams,
        cost_estimate=cost,
    )(x_view, w_mat, b_vec.reshape(c_out, 1))
    return out_view.reshape(n, c_out, d, h, w)


if __name__ == "__main__":
    key = jax.random.PRNGKey(0)
    k_x, k_w, k_b = jax.random.split(key, 3)

    # Small shapes consistent with Conv3d forward: [N, C_in, D, H, W]; S = D*H*W = 256.
    N, C_IN, D, H, W = 2, 4, 4, 8, 8
    C_OUT = 8

    x = jax.random.normal(k_x, (N, C_IN, D, H, W), dtype=jnp.float32)

    # Deterministic parameter init (mimics PyTorch's uniform fan-in scaling).
    fan_in = C_IN  # kernel_size = 1*1*1
    bound = 1.0 / jnp.sqrt(fan_in)
    weight = jax.random.uniform(
        k_w, (C_OUT, C_IN, 1, 1, 1), dtype=jnp.float32, minval=-bound, maxval=bound
    )
    bias = jax.random.uniform(
        k_b, (C_OUT,), dtype=jnp.float32, minval=-bound, maxval=bound
    )

    out = linear_mapping_layer(x, weight, bias)
    jax.block_until_ready(out)

    # Sanity check against a plain-JAX reference (einsum == 1x1x1 Conv3d).
    ref = jnp.einsum("ncdhw,oc->nodhw", x, weight.reshape(C_OUT, C_IN)) + bias[
        None, :, None, None, None
    ]
    assert out.shape == (N, C_OUT, D, H, W), out.shape
    assert jnp.allclose(out, ref, atol=1e-5, rtol=1e-5), "mismatch vs reference"

    print("KERNEL_OK")
</pallas_src>

<mosaic_0001>
module attributes {stable_mosaic.version = 11 : i64} {
  func.func @vpu_kernel(%arg0: i32, %arg1: i32, %arg2: memref<2x4x2x128xf32, #tpu.memory_space<vmem>>, %arg3: memref<8x4xf32, #tpu.memory_space<smem>>, %arg4: memref<8xf32, #tpu.memory_space<smem>>, %arg5: memref<2x8x2x128xf32, #tpu.memory_space<vmem>>) attributes {dimension_semantics = [#tpu.dimension_semantics<parallel>, #tpu.dimension_semantics<parallel>], iteration_bounds = array<i64: 1, 1>, scalar_prefetch = 0 : i64, scratch_operands = 0 : i64, tpu.core_type = #tpu.core_type<tc>, window_params = [{transform_indices = @transform_0, window_bounds = array<i64: 2, 4, 2, 128>}, {transform_indices = @transform_1, window_bounds = array<i64: 8, 4>}, {transform_indices = @transform_2, window_bounds = array<i64: 8>}, {transform_indices = @transform_3, window_bounds = array<i64: 2, 8, 2, 128>}]} {
    %c0 = arith.constant 0 : index
    %c0_0 = arith.constant 0 : index
    %c0_1 = arith.constant 0 : index
    %c0_2 = arith.constant 0 : index
    %0 = vector.load %arg2[%c0, %c0_0, %c0_1, %c0_2] : memref<2x4x2x128xf32, #tpu.memory_space<vmem>>, vector<2x1x2x128xf32>
    %1 = vector.shape_cast %0 : vector<2x1x2x128xf32> to vector<2x2x128xf32>
    %c0_3 = arith.constant 0 : index
    %c1 = arith.constant 1 : index
    %c0_4 = arith.constant 0 : index
    %c0_5 = arith.constant 0 : index
    %2 = vector.load %arg2[%c0_3, %c1, %c0_4, %c0_5] : memref<2x4x2x128xf32, #tpu.memory_space<vmem>>, vector<2x1x2x128xf32>
    %3 = vector.shape_cast %2 : vector<2x1x2x128xf32> to vector<2x2x128xf32>
    %c0_6 = arith.constant 0 : index
    %c2 = arith.constant 2 : index
    %c0_7 = arith.constant 0 : index
    %c0_8 = arith.constant 0 : index
    %4 = vector.load %arg2[%c0_6, %c2, %c0_7, %c0_8] : memref<2x4x2x128xf32, #tpu.memory_space<vmem>>, vector<2x1x2x128xf32>
    %5 = vector.shape_cast %4 : vector<2x1x2x128xf32> to vector<2x2x128xf32>
    %c0_9 = arith.constant 0 : index
    %c3 = arith.constant 3 : index
    %c0_10 = arith.constant 0 : index
    %c0_11 = arith.constant 0 : index
    %6 = vector.load %arg2[%c0_9, %c3, %c0_10, %c0_11] : memref<2x4x2x128xf32, #tpu.memory_space<vmem>>, vector<2x1x2x128xf32>
    %7 = vector.shape_cast %6 : vector<2x1x2x128xf32> to vector<2x2x128xf32>
    %c0_12 = arith.constant 0 : index
    %c0_13 = arith.constant 0 : index
    %8 = memref.load %arg3[%c0_12, %c0_13] : memref<8x4xf32, #tpu.memory_space<smem>>
    %9 = vector.broadcast %8 : f32 to vector<2x2x128xf32>
    %10 = arith.mulf %1, %9 : vector<2x2x128xf32>
    %c0_14 = arith.constant 0 : index
    %c1_15 = arith.constant 1 : index
    %11 = memref.load %arg3[%c0_14, %c1_15] : memref<8x4xf32, #tpu.memory_space<smem>>
    %12 = vector.broadcast %11 : f32 to vector<2x2x128xf32>
    %13 = arith.mulf %3, %12 : vector<2x2x128xf32>
    %14 = arith.addf %10, %13 : vector<2x2x128xf32>
    %c0_16 = arith.constant 0 : index
    %c2_17 = arith.constant 2 : index
    %15 = memref.load %arg3[%c0_16, %c2_17] : memref<8x4xf32, #tpu.memory_space<smem>>
    %16 = vector.broadcast %15 : f32 to vector<2x2x128xf32>
    %17 = arith.mulf %5, %16 : vector<2x2x128xf32>
    %18 = arith.addf %14, %17 : vector<2x2x128xf32>
    %c0_18 = arith.constant 0 : index
    %c3_19 = arith.constant 3 : index
    %19 = memref.load %arg3[%c0_18, %c3_19] : memref<8x4xf32, #tpu.memory_space<smem>>
    %20 = vector.broadcast %19 : f32 to vector<2x2x128xf32>
    %21 = arith.mulf %7, %20 : vector<2x2x128xf32>
    %22 = arith.addf %18, %21 : vector<2x2x128xf32>
    %c0_20 = arith.constant 0 : index
    %23 = memref.load %arg4[%c0_20] : memref<8xf32, #tpu.memory_space<smem>>
    %24 = vector.broadcast %23 : f32 to vector<2x2x128xf32>
    %25 = arith.addf %22, %24 : vector<2x2x128xf32>
    %c0_21 = arith.constant 0 : index
    %c0_22 = arith.constant 0 : index
    %c0_23 = arith.constant 0 : index
    %c0_24 = arith.constant 0 : index
    %26 = vector.load %arg5[%c0_21, %c0_22, %c0_23, %c0_24] : memref<2x8x2x128xf32, #tpu.memory_space<vmem>>, vector<2x1x2x128xf32>
    %27 = vector.shape_cast %26 : vector<2x1x2x128xf32> to vector<2x2x128xf32>
    %28 = vector.shape_cast %25 : vector<2x2x128xf32> to vector<2x1x2x128xf32>
    tpu.vector_store %arg5[%c0_21, %c0_22, %c0_23, %c0_24], %28 {strides = array<i32>} : memref<2x8x2x128xf32, #tpu.memory_space<vmem>>, vector<2x1x2x128xf32>,
    %c1_25 = arith.constant 1 : index
    %c0_26 = arith.constant 0 : index
    %29 = memref.load %arg3[%c1_25, %c0_26] : memref<8x4xf32, #tpu.memory_space<smem>>
    %30 = vector.broadcast %29 : f32 to vector<2x2x128xf32>
    %31 = arith.mulf %1, %30 : vector<2x2x128xf32>
    %c1_27 = arith.constant 1 : index
    %c1_28 = arith.constant 1 : index
    %32 = memref.load %arg3[%c1_27, %c1_28] : memref<8x4xf32, #tpu.memory_space<smem>>
    %33 = vector.broadcast %32 : f32 to vector<2x2x128xf32>
    %34 = arith.mulf %3, %33 : vector<2x2x128xf32>
    %35 = arith.addf %31, %34 : vector<2x2x128xf32>
    %c1_29 = arith.constant 1 : index
    %c2_30 = arith.constant 2 : index
    %36 = memref.load %arg3[%c1_29, %c2_30] : memref<8x4xf32, #tpu.memory_space<smem>>
    %37 = vector.broadcast %36 : f32 to vector<2x2x128xf32>
    %38 = arith.mulf %5, %37 : vector<2x2x128xf32>
    %39 = arith.addf %35, %38 : vector<2x2x128xf32>
    %c1_31 = arith.constant 1 : index
    %c3_32 = arith.constant 3 : index
    %40 = memref.load %arg3[%c1_31, %c3_32] : memref<8x4xf32, #tpu.memory_space<smem>>
    %41 = vector.broadcast %40 : f32 to vector<2x2x128xf32>
    %42 = arith.mulf %7, %41 : vector<2x2x128xf32>
    %43 = arith.addf %39, %42 : vector<2x2x128xf32>
    %c1_33 = arith.constant 1 : index
    %44 = memref.load %arg4[%c1_33] : memref<8xf32, #tpu.memory_space<smem>>
    %45 = vector.broadcast %44 : f32 to vector<2x2x128xf32>
    %46 = arith.addf %43, %45 : vector<2x2x128xf32>
    %c0_34 = arith.constant 0 : index
    %c1_35 = arith.constant 1 : index
    %c0_36 = arith.constant 0 : index
    %c0_37 = arith.constant 0 : index
    %47 = vector.load %arg5[%c0_34, %c1_35, %c0_36, %c0_37] : memref<2x8x2x128xf32, #tpu.memory_space<vmem>>, vector<2x1x2x128xf32>
    %48 = vector.shape_cast %47 : vector<2x1x2x128xf32> to vector<2x2x128xf32>
    %49 = vector.shape_cast %46 : vector<2x2x128xf32> to vector<2x1x2x128xf32>
    tpu.vector_store %arg5[%c0_34, %c1_35, %c0_36, %c0_37], %49 {strides = array<i32>} : memref<2x8x2x128xf32, #tpu.memory_space<vmem>>, vector<2x1x2x128xf32>,
    %c2_38 = arith.constant 2 : index
    %c0_39 = arith.constant 0 : index
    %50 = memref.load %arg3[%c2_38, %c0_39] : memref<8x4xf32, #tpu.memory_space<smem>>
    %51 = vector.broadcast %50 : f32 to vector<2x2x128xf32>
    %52 = arith.mulf %1, %51 : vector<2x2x128xf32>
    %c2_40 = arith.constant 2 : index
    %c1_41 = arith.constant 1 : index
    %53 = memref.load %arg3[%c2_40, %c1_41] : memref<8x4xf32, #tpu.memory_space<smem>>
    %54 = vector.broadcast %53 : f32 to vector<2x2x128xf32>
    %55 = arith.mulf %3, %54 : vector<2x2x128xf32>
    %56 = arith.addf %52, %55 : vector<2x2x128xf32>
    %c2_42 = arith.constant 2 : index
    %c2_43 = arith.constant 2 : index
    %57 = memref.load %arg3[%c2_42, %c2_43] : memref<8x4xf32, #tpu.memory_space<smem>>
    %58 = vector.broadcast %57 : f32 to vector<2x2x128xf32>
    %59 = arith.mulf %5, %58 : vector<2x2x128xf32>
    %60 = arith.addf %56, %59 : vector<2x2x128xf32>
    %c2_44 = arith.constant 2 : index
    %c3_45 = arith.constant 3 : index
    %61 = memref.load %arg3[%c2_44, %c3_45] : memref<8x4xf32, #tpu.memory_space<smem>>
    %62 = vector.broadcast %61 : f32 to vector<2x2x128xf32>
    %63 = arith.mulf %7, %62 : vector<2x2x128xf32>
    %64 = arith.addf %60, %63 : vector<2x2x128xf32>
    %c2_46 = arith.constant 2 : index
    %65 = memref.load %arg4[%c2_46] : memref<8xf32, #tpu.memory_space<smem>>
    %66 = vector.broadcast %65 : f32 to vector<2x2x128xf32>
    %67 = arith.addf %64, %66 : vector<2x2x128xf32>
    %c0_47 = arith.constant 0 : index
    %c2_48 = arith.constant 2 : index
    %c0_49 = arith.constant 0 : index
    %c0_50 = arith.constant 0 : index
    %68 = vector.load %arg5[%c0_47, %c2_48, %c0_49, %c0_50] : memref<2x8x2x128xf32, #tpu.memory_space<vmem>>, vector<2x1x2x128xf32>
    %69 = vector.shape_cast %68 : vector<2x1x2x128xf32> to vector<2x2x128xf32>
    %70 = vector.shape_cast %67 : vector<2x2x128xf32> to vector<2x1x2x128xf32>
    tpu.vector_store %arg5[%c0_47, %c2_48, %c0_49, %c0_50], %70 {strides = array<i32>} : memref<2x8x2x128xf32, #tpu.memory_space<vmem>>, vector<2x1x2x128xf32>,
    %c3_51 = arith.constant 3 : index
    %c0_52 = arith.constant 0 : index
    %71 = memref.load %arg3[%c3_51, %c0_52] : memref<8x4xf32, #tpu.memory_space<smem>>
    %72 = vector.broadcast %71 : f32 to vector<2x2x128xf32>
    %73 = arith.mulf %1, %72 : vector<2x2x128xf32>
    %c3_53 = arith.constant 3 : index
    %c1_54 = arith.constant 1 : index
    %74 = memref.load %arg3[%c3_53, %c1_54] : memref<8x4xf32, #tpu.memory_space<smem>>
    %75 = vector.broadcast %74 : f32 to vector<2x2x128xf32>
    %76 = arith.mulf %3, %75 : vector<2x2x128xf32>
    %77 = arith.addf %73, %76 : vector<2x2x128xf32>
    %c3_55 = arith.constant 3 : index
    %c2_56 = arith.constant 2 : index
    %78 = memref.load %arg3[%c3_55, %c2_56] : memref<8x4xf32, #tpu.memory_space<smem>>
    %79 = vector.broadcast %78 : f32 to vector<2x2x128xf32>
    %80 = arith.mulf %5, %79 : vector<2x2x128xf32>
    %81 = arith.addf %77, %80 : vector<2x2x128xf32>
    %c3_57 = arith.constant 3 : index
    %c3_58 = arith.constant 3 : index
    %82 = memref.load %arg3[%c3_57, %c3_58] : memref<8x4xf32, #tpu.memory_space<smem>>
    %83 = vector.broadcast %82 : f32 to vector<2x2x128xf32>
    %84 = arith.mulf %7, %83 : vector<2x2x128xf32>
    %85 = arith.addf %81, %84 : vector<2x2x128xf32>
    %c3_59 = arith.constant 3 : index
    %86 = memref.load %arg4[%c3_59] : memref<8xf32, #tpu.memory_space<smem>>
    %87 = vector.broadcast %86 : f32 to vector<2x2x128xf32>
    %88 = arith.addf %85, %87 : vector<2x2x128xf32>
    %c0_60 = arith.constant 0 : index
    %c3_61 = arith.constant 3 : index
    %c0_62 = arith.constant 0 : index
    %c0_63 = arith.constant 0 : index
    %89 = vector.load %arg5[%c0_60, %c3_61, %c0_62, %c0_63] : memref<2x8x2x128xf32, #tpu.memory_space<vmem>>, vector<2x1x2x128xf32>
    %90 = vector.shape_cast %89 : vector<2x1x2x128xf32> to vector<2x2x128xf32>
    %91 = vector.shape_cast %88 : vector<2x2x128xf32> to vector<2x1x2x128xf32>
    tpu.vector_store %arg5[%c0_60, %c3_61, %c0_62, %c0_63], %91 {strides = array<i32>} : memref<2x8x2x128xf32, #tpu.memory_space<vmem>>, vector<2x1x2x128xf32>,
    %c4 = arith.constant 4 : index
    %c0_64 = arith.constant 0 : index
    %92 = memref.load %arg3[%c4, %c0_64] : memref<8x4xf32, #tpu.memory_space<smem>>
    %93 = vector.broadcast %92 : f32 to vector<2x2x128xf32>
    %94 = arith.mulf %1, %93 : vector<2x2x128xf32>
    %c4_65 = arith.constant 4 : index
    %c1_66 = arith.constant 1 : index
    %95 = memref.load %arg3[%c4_65, %c1_66] : memref<8x4xf32, #tpu.memory_space<smem>>
    %96 = vector.broadcast %95 : f32 to vector<2x2x128xf32>
    %97 = arith.mulf %3, %96 : vector<2x2x128xf32>
    %98 = arith.addf %94, %97 : vector<2x2x128xf32>
    %c4_67 = arith.constant 4 : index
    %c2_68 = arith.constant 2 : index
    %99 = memref.load %arg3[%c4_67, %c2_68] : memref<8x4xf32, #tpu.memory_space<smem>>
    %100 = vector.broadcast %99 : f32 to vector<2x2x128xf32>
    %101 = arith.mulf %5, %100 : vector<2x2x128xf32>
    %102 = arith.addf %98, %101 : vector<2x2x128xf32>
    %c4_69 = arith.constant 4 : index
    %c3_70 = arith.constant 3 : index
    %103 = memref.load %arg3[%c4_69, %c3_70] : memref<8x4xf32, #tpu.memory_space<smem>>
    %104 = vector.broadcast %103 : f32 to vector<2x2x128xf32>
    %105 = arith.mulf %7, %104 : vector<2x2x128xf32>
    %106 = arith.addf %102, %105 : vector<2x2x128xf32>
    %c4_71 = arith.constant 4 : index
    %107 = memref.load %arg4[%c4_71] : memref<8xf32, #tpu.memory_space<smem>>
    %108 = vector.broadcast %107 : f32 to vector<2x2x128xf32>
    %109 = arith.addf %106, %108 : vector<2x2x128xf32>
    %c0_72 = arith.constant 0 : index
    %c4_73 = arith.constant 4 : index
    %c0_74 = arith.constant 0 : index
    %c0_75 = arith.constant 0 : index
    %110 = vector.load %arg5[%c0_72, %c4_73, %c0_74, %c0_75] : memref<2x8x2x128xf32, #tpu.memory_space<vmem>>, vector<2x1x2x128xf32>
    %111 = vector.shape_cast %110 : vector<2x1x2x128xf32> to vector<2x2x128xf32>
    %112 = vector.shape_cast %109 : vector<2x2x128xf32> to vector<2x1x2x128xf32>
    tpu.vector_store %arg5[%c0_72, %c4_73, %c0_74, %c0_75], %112 {strides = array<i32>} : memref<2x8x2x128xf32, #tpu.memory_space<vmem>>, vector<2x1x2x128xf32>,
    %c5 = arith.constant 5 : index
    %c0_76 = arith.constant 0 : index
    %113 = memref.load %arg3[%c5, %c0_76] : memref<8x4xf32, #tpu.memory_space<smem>>
    %114 = vector.broadcast %113 : f32 to vector<2x2x128xf32>
    %115 = arith.mulf %1, %114 : vector<2x2x128xf32>
    %c5_77 = arith.constant 5 : index
    %c1_78 = arith.constant 1 : index
    %116 = memref.load %arg3[%c5_77, %c1_78] : memref<8x4xf32, #tpu.memory_space<smem>>
    %117 = vector.broadcast %116 : f32 to vector<2x2x128xf32>
    %118 = arith.mulf %3, %117 : vector<2x2x128xf32>
    %119 = arith.addf %115, %118 : vector<2x2x128xf32>
    %c5_79 = arith.constant 5 : index
    %c2_80 = arith.constant 2 : index
    %120 = memref.load %arg3[%c5_79, %c2_80] : memref<8x4xf32, #tpu.memory_space<smem>>
    %121 = vector.broadcast %120 : f32 to vector<2x2x128xf32>
    %122 = arith.mulf %5, %121 : vector<2x2x128xf32>
    %123 = arith.addf %119, %122 : vector<2x2x128xf32>
    %c5_81 = arith.constant 5 : index
    %c3_82 = arith.constant 3 : index
    %124 = memref.load %arg3[%c5_81, %c3_82] : memref<8x4xf32, #tpu.memory_space<smem>>
    %125 = vector.broadcast %124 : f32 to vector<2x2x128xf32>
    %126 = arith.mulf %7, %125 : vector<2x2x128xf32>
    %127 = arith.addf %123, %126 : vector<2x2x128xf32>
    %c5_83 = arith.constant 5 : index
    %128 = memref.load %arg4[%c5_83] : memref<8xf32, #tpu.memory_space<smem>>
    %129 = vector.broadcast %128 : f32 to vector<2x2x128xf32>
    %130 = arith.addf %127, %129 : vector<2x2x128xf32>
    %c0_84 = arith.constant 0 : index
    %c5_85 = arith.constant 5 : index
    %c0_86 = arith.constant 0 : index
    %c0_87 = arith.constant 0 : index
    %131 = vector.load %arg5[%c0_84, %c5_85, %c0_86, %c0_87] : memref<2x8x2x128xf32, #tpu.memory_space<vmem>>, vector<2x1x2x128xf32>
    %132 = vector.shape_cast %131 : vector<2x1x2x128xf32> to vector<2x2x128xf32>
    %133 = vector.shape_cast %130 : vector<2x2x128xf32> to vector<2x1x2x128xf32>
    tpu.vector_store %arg5[%c0_84, %c5_85, %c0_86, %c0_87], %133 {strides = array<i32>} : memref<2x8x2x128xf32, #tpu.memory_space<vmem>>, vector<2x1x2x128xf32>,
    %c6 = arith.constant 6 : index
    %c0_88 = arith.constant 0 : index
    %134 = memref.load %arg3[%c6, %c0_88] : memref<8x4xf32, #tpu.memory_space<smem>>
    %135 = vector.broadcast %134 : f32 to vector<2x2x128xf32>
    %136 = arith.mulf %1, %135 : vector<2x2x128xf32>
    %c6_89 = arith.constant 6 : index
    %c1_90 = arith.constant 1 : index
    %137 = memref.load %arg3[%c6_89, %c1_90] : memref<8x4xf32, #tpu.memory_space<smem>>
    %138 = vector.broadcast %137 : f32 to vector<2x2x128xf32>
    %139 = arith.mulf %3, %138 : vector<2x2x128xf32>
    %140 = arith.addf %136, %139 : vector<2x2x128xf32>
    %c6_91 = arith.constant 6 : index
    %c2_92 = arith.constant 2 : index
    %141 = memref.load %arg3[%c6_91, %c2_92] : memref<8x4xf32, #tpu.memory_space<smem>>
    %142 = vector.broadcast %141 : f32 to vector<2x2x128xf32>
    %143 = arith.mulf %5, %142 : vector<2x2x128xf32>
    %144 = arith.addf %140, %143 : vector<2x2x128xf32>
    %c6_93 = arith.constant 6 : index
    %c3_94 = arith.constant 3 : index
    %145 = memref.load %arg3[%c6_93, %c3_94] : memref<8x4xf32, #tpu.memory_space<smem>>
    %146 = vector.broadcast %145 : f32 to vector<2x2x128xf32>
    %147 = arith.mulf %7, %146 : vector<2x2x128xf32>
    %148 = arith.addf %144, %147 : vector<2x2x128xf32>
    %c6_95 = arith.constant 6 : index
    %149 = memref.load %arg4[%c6_95] : memref<8xf32, #tpu.memory_space<smem>>
    %150 = vector.broadcast %149 : f32 to vector<2x2x128xf32>
    %151 = arith.addf %148, %150 : vector<2x2x128xf32>
    %c0_96 = arith.constant 0 : index
    %c6_97 = arith.constant 6 : index
    %c0_98 = arith.constant 0 : index
    %c0_99 = arith.constant 0 : index
    %152 = vector.load %arg5[%c0_96, %c6_97, %c0_98, %c0_99] : memref<2x8x2x128xf32, #tpu.memory_space<vmem>>, vector<2x1x2x128xf32>
    %153 = vector.shape_cast %152 : vector<2x1x2x128xf32> to vector<2x2x128xf32>
    %154 = vector.shape_cast %151 : vector<2x2x128xf32> to vector<2x1x2x128xf32>
    tpu.vector_store %arg5[%c0_96, %c6_97, %c0_98, %c0_99], %154 {strides = array<i32>} : memref<2x8x2x128xf32, #tpu.memory_space<vmem>>, vector<2x1x2x128xf32>,
    %c7 = arith.constant 7 : index
    %c0_100 = arith.constant 0 : index
    %155 = memref.load %arg3[%c7, %c0_100] : memref<8x4xf32, #tpu.memory_space<smem>>
    %156 = vector.broadcast %155 : f32 to vector<2x2x128xf32>
    %157 = arith.mulf %1, %156 : vector<2x2x128xf32>
    %c7_101 = arith.constant 7 : index
    %c1_102 = arith.constant 1 : index
    %158 = memref.load %arg3[%c7_101, %c1_102] : memref<8x4xf32, #tpu.memory_space<smem>>
    %159 = vector.broadcast %158 : f32 to vector<2x2x128xf32>
    %160 = arith.mulf %3, %159 : vector<2x2x128xf32>
    %161 = arith.addf %157, %160 : vector<2x2x128xf32>
    %c7_103 = arith.constant 7 : index
    %c2_104 = arith.constant 2 : index
    %162 = memref.load %arg3[%c7_103, %c2_104] : memref<8x4xf32, #tpu.memory_space<smem>>
    %163 = vector.broadcast %162 : f32 to vector<2x2x128xf32>
    %164 = arith.mulf %5, %163 : vector<2x2x128xf32>
    %165 = arith.addf %161, %164 : vector<2x2x128xf32>
    %c7_105 = arith.constant 7 : index
    %c3_106 = arith.constant 3 : index
    %166 = memref.load %arg3[%c7_105, %c3_106] : memref<8x4xf32, #tpu.memory_space<smem>>
    %167 = vector.broadcast %166 : f32 to vector<2x2x128xf32>
    %168 = arith.mulf %7, %167 : vector<2x2x128xf32>
    %169 = arith.addf %165, %168 : vector<2x2x128xf32>
    %c7_107 = arith.constant 7 : index
    %170 = memref.load %arg4[%c7_107] : memref<8xf32, #tpu.memory_space<smem>>
    %171 = vector.broadcast %170 : f32 to vector<2x2x128xf32>
    %172 = arith.addf %169, %171 : vector<2x2x128xf32>
    %c0_108 = arith.constant 0 : index
    %c7_109 = arith.constant 7 : index
    %c0_110 = arith.constant 0 : index
    %c0_111 = arith.constant 0 : index
    %173 = vector.load %arg5[%c0_108, %c7_109, %c0_110, %c0_111] : memref<2x8x2x128xf32, #tpu.memory_space<vmem>>, vector<2x1x2x128xf32>
    %174 = vector.shape_cast %173 : vector<2x1x2x128xf32> to vector<2x2x128xf32>
    %175 = vector.shape_cast %172 : vector<2x2x128xf32> to vector<2x1x2x128xf32>
    tpu.vector_store %arg5[%c0_108, %c7_109, %c0_110, %c0_111], %175 {strides = array<i32>} : memref<2x8x2x128xf32, #tpu.memory_space<vmem>>, vector<2x1x2x128xf32>,
    return
  }
  func.func @transform_0(%arg0: i32, %arg1: i32) -> (i32, i32, i32, i32) {
    %c0_i32 = arith.constant 0 : i32
    %c0_i32_0 = arith.constant 0 : i32
    %c0_i32_1 = arith.constant 0 : i32
    return %arg0, %c0_i32, %arg1, %c0_i32_0 : i32, i32, i32, i32
  }
  func.func @transform_1(%arg0: i32, %arg1: i32) -> (i32, i32) {
    %c0_i32 = arith.constant 0 : i32
    %c0_i32_0 = arith.constant 0 : i32
    %c0_i32_1 = arith.constant 0 : i32
    return %c0_i32, %c0_i32_0 : i32, i32
  }
  func.func @transform_2(%arg0: i32, %arg1: i32) -> i32 {
    %c0_i32 = arith.constant 0 : i32
    %c0_i32_0 = arith.constant 0 : i32
    return %c0_i32 : i32
  }
  func.func @transform_3(%arg0: i32, %arg1: i32) -> (i32, i32, i32, i32) {
    %c0_i32 = arith.constant 0 : i32
    %c0_i32_0 = arith.constant 0 : i32
    %c0_i32_1 = arith.constant 0 : i32
    return %arg0, %c0_i32, %arg1, %c0_i32_0 : i32, i32, i32, i32
  }
}

</mosaic_0001>

<llo_original>
// kernel: linear_mapping_layer.1
$region0: #{linear_mapping_layer.1}
  #allocation0 [shape = 'u32[]', space=smem, size = 0x4, offset = 0x4, fixed_abs, tag = 'smem constant byte address 0x4 - core index']
  #allocation1 [shape = 'u32[144,128]{1,0:T(1,128)}', space=vmem, size = 0x12000, scoped, tag = 'internal scratch']
  %s0 = inlined_call_operand.vmem [shape: f32[2,4,2,128], index: 0, kind: input, shape index: {}]
  %s1 = inlined_call_operand.vmem [shape: f32[8,4], index: 1, kind: input, shape index: {}]
  %s2 = inlined_call_operand.vmem [shape: f32[8], index: 2, kind: input, shape index: {}]
  %s3 = inlined_call_operand.vmem [shape: f32[2,8,2,128], index: 3, kind: output, shape index: {}]
  %s4 = sld [smem:[#allocation0]]
  $region30: #{linear_mapping_layer.1} parent=0
    _
  %s6 = ssub.s32 1, %s4
  %s7 = scalar_select 0, %s6, %s4
  $region1: #{linear_mapping_layer.1} parent=0
    #allocation2 [shape = 'u8[4096]{0}', space=smem, size = 0x1000, scoped, tag = 'input window, operand 1, single buffered']
    #allocation3 [shape = 's32[1]{0}', space=sflag, size = 0x4, scoped, tag = 'scoped memory for linear_mapping_layer.1']
    #allocation4 [shape = 'u8[512]{0}', space=smem, size = 0x200, scoped, tag = 'input window, operand 2, single buffered']
    #allocation5 [shape = 's32[1]{0}', space=sflag, size = 0x4, scoped, tag = 'scoped memory for linear_mapping_layer.1']
    %8 = vsyncpa [#allocation3], 0
    %9 = vsyncpa [#allocation5], 0
    // Predicated region
    $region2: #{linear_mapping_layer.1} parent=1 // pred_check
      _
    $region3: #{linear_mapping_layer.1} parent=1 // pred_check_branch
      %11 = sbr.rel (0) target = $region5
    $region4: #{linear_mapping_layer.1} parent=1 // pred_region
      _
    $region5: #{linear_mapping_layer.1} parent=1 // pred_fallthru
      _
    // Predicated region
    $region6: #{linear_mapping_layer.1} parent=1 // pred_check
      _
    $region7: #{linear_mapping_layer.1} parent=1 // pred_check_branch
      %13 = sbr.rel (0) target = $region9
    $region8: #{linear_mapping_layer.1} parent=1 // pred_region
      %s15 = ssub.s32 128, 128
      %16 = vsyncadd [#allocation3], %s15
      %s18 = sshll.u32 %s1, 4
      %s19 = int_to_ptr.vmem [resolvable:$true] %s18
      %21 = dma.vmem_to_smem %s19, 128, [#allocation2], [#allocation3]
    $region9: #{linear_mapping_layer.1} parent=1 // pred_fallthru
      _
    // Predicated region
    $region10: #{linear_mapping_layer.1} parent=1 // pred_check
      _
    $region11: #{linear_mapping_layer.1} parent=1 // pred_check_branch
      %23 = sbr.rel (0) target = $region13
    $region12: #{linear_mapping_layer.1} parent=1 // pred_region
      %s25 = ssub.s32 16, 16
      %26 = vsyncadd [#allocation5], %s25
      %s28 = sshll.u32 %s2, 4
      %s29 = int_to_ptr.vmem [resolvable:$true] %s28
      %31 = dma.vmem_to_smem %s29, 16, [#allocation4], [#allocation5]
    $region13: #{linear_mapping_layer.1} parent=1 // pred_fallthru
      _
    // Predicated region
    $region14: #{linear_mapping_layer.1} parent=1 // pred_check
      _
    $region15: #{linear_mapping_layer.1} parent=1 // pred_check_branch
      %33 = sbr.rel (0) target = $region17
    $region16: #{linear_mapping_layer.1} parent=1 // pred_region
      %34 = dma.done [#allocation3], 128
    $region17: #{linear_mapping_layer.1} parent=1 // pred_fallthru
      _
    // Predicated region
    $region18: #{linear_mapping_layer.1} parent=1 // pred_check
      _
    $region19: #{linear_mapping_layer.1} parent=1 // pred_check_branch
      %36 = sbr.rel (0) target = $region21
    $region20: #{linear_mapping_layer.1} parent=1 // pred_region
      %37 = dma.done [#allocation5], 16
    $region21: #{linear_mapping_layer.1} parent=1 // pred_fallthru
      _
    %38 = sfence
    %v39 = vld [vmem:[%s0] sm:$0x3]
    %v40 = vld [vmem:[%s0 + $0x8] sm:$0x3]
    %s41 = scalar_lea.vmem %s0, 2
    %v42 = vld [vmem:[%s41] sm:$0x3]
    %v43 = vld [vmem:[%s41 + $0x8] sm:$0x3]
    %s44 = scalar_lea.vmem %s0, 4
    %v45 = vld [vmem:[%s44] sm:$0x3]
    %v46 = vld [vmem:[%s44 + $0x8] sm:$0x3]
    %s47 = scalar_lea.vmem %s0, 6
    %v48 = vld [vmem:[%s47] sm:$0x3]
    %v49 = vld [vmem:[%s47 + $0x8] sm:$0x3]
    %s50 = sld [smem:[#allocation2]]
    %v51 = vstv %s50
    %v52 = vmul.f32 %v39, %v51
    %v53 = vmul.f32 %v40, %v51
    %s54 = sld [smem:[#allocation2 + $0x1]]
    %v55 = vstv %s54
    %v56 = vmul.f32 %v42, %v55
    %v57 = vmul.f32 %v43, %v55
    %v58 = vadd.f32 %v52, %v56
    %v59 = vadd.f32 %v53, %v57
    %s60 = sld [smem:[#allocation2 + $0x2]]
    %v61 = vstv %s60
    %v62 = vmul.f32 %v45, %v61
    %v63 = vmul.f32 %v46, %v61
    %v64 = vadd.f32 %v58, %v62
    %v65 = vadd.f32 %v59, %v63
    %s66 = sld [smem:[#allocation2 + $0x3]]
    %v67 = vstv %s66
    %v68 = vmul.f32 %v48, %v67
    %v69 = vmul.f32 %v49, %v67
    %v70 = vadd.f32 %v64, %v68
    %v71 = vadd.f32 %v65, %v69
    %s72 = sld [smem:[#allocation4]]
    %v73 = vstv %s72
    %v74 = vadd.f32 %v70, %v73
    %v75 = vadd.f32 %v71, %v73
    %76 = vst [vmem:[%s3] sm:$0x3] %v74
    %77 = vst [vmem:[%s3 + $0x10] sm:$0x3] %v75
    %s78 = sld [smem:[#allocation2 + $0x80]]
    %v79 = vstv %s78
    %v80 = vmul.f32 %v39, %v79
    %v81 = vmul.f32 %v40, %v79
    %s82 = sld [smem:[#allocation2 + $0x81]]
    %v83 = vstv %s82
    %v84 = vmul.f32 %v42, %v83
    %v85 = vmul.f32 %v43, %v83
    %v86 = vadd.f32 %v80, %v84
    %v87 = vadd.f32 %v81, %v85
    %s88 = sld [smem:[#allocation2 + $0x82]]
    %v89 = vstv %s88
    %v90 = vmul.f32 %v45, %v89
    %v91 = vmul.f32 %v46, %v89
    %v92 = vadd.f32 %v86, %v90
    %v93 = vadd.f32 %v87, %v91
    %s94 = sld [smem:[#allocation2 + $0x83]]
    %v95 = vstv %s94
    %v96 = vmul.f32 %v48, %v95
    %v97 = vmul.f32 %v49, %v95
    %v98 = vadd.f32 %v92, %v96
    %v99 = vadd.f32 %v93, %v97
    %s100 = sld [smem:[#allocation4 + $0x1]]
    %v101 = vstv %s100
    %v102 = vadd.f32 %v98, %v101
    %v103 = vadd.f32 %v99, %v101
    %s104 = scalar_lea.vmem %s3, 2
    %105 = vst [vmem:[%s104] sm:$0x3] %v102
    %106 = vst [vmem:[%s104 + $0x10] sm:$0x3] %v103
    %s107 = sld [smem:[#allocation2 + $0x100]]
    %v108 = vstv %s107
    %v109 = vmul.f32 %v39, %v108
    %v110 = vmul.f32 %v40, %v108
    %s111 = sld [smem:[#allocation2 + $0x101]]
    %v112 = vstv %s111
    %v113 = vmul.f32 %v42, %v112
    %v114 = vmul.f32 %v43, %v112
    %v115 = vadd.f32 %v109, %v113
    %v116 = vadd.f32 %v110, %v114
    %s117 = sld [smem:[#allocation2 + $0x102]]
    %v118 = vstv %s117
    %v119 = vmul.f32 %v45, %v118
    %v120 = vmul.f32 %v46, %v118
    %v121 = vadd.f32 %v115, %v119
    %v122 = vadd.f32 %v116, %v120
    %s123 = sld [smem:[#allocation2 + $0x103]]
    %v124 = vstv %s123
    %v125 = vmul.f32 %v48, %v124
    %v126 = vmul.f32 %v49, %v124
    %v127 = vadd.f32 %v121, %v125
    %v128 = vadd.f32 %v122, %v126
    %s129 = sld [smem:[#allocation4 + $0x2]]
    %v130 = vstv %s129
    %v131 = vadd.f32 %v127, %v130
    %v132 = vadd.f32 %v128, %v130
    %s133 = scalar_lea.vmem %s3, 4
    %134 = vst [vmem:[%s133] sm:$0x3] %v131
    %135 = vst [vmem:[%s133 + $0x10] sm:$0x3] %v132
    %s136 = sld [smem:[#allocation2 + $0x180]]
    %v137 = vstv %s136
    %v138 = vmul.f32 %v39, %v137
    %v139 = vmul.f32 %v40, %v137
    %s140 = sld [smem:[#allocation2 + $0x181]]
    %v141 = vstv %s140
    %v142 = vmul.f32 %v42, %v141
    %v143 = vmul.f32 %v43, %v141
    %v144 = vadd.f32 %v138, %v142
    %v145 = vadd.f32 %v139, %v143
    %s146 = sld [smem:[#allocation2 + $0x182]]
    %v147 = vstv %s146
    %v148 = vmul.f32 %v45, %v147
    %v149 = vmul.f32 %v46, %v147
    %v150 = vadd.f32 %v144, %v148
    %v151 = vadd.f32 %v145, %v149
    %s152 = sld [smem:[#allocation2 + $0x183]]
    %v153 = vstv %s152
    %v154 = vmul.f32 %v48, %v153
    %v155 = vmul.f32 %v49, %v153
    %v156 = vadd.f32 %v150, %v154
    %v157 = vadd.f32 %v151, %v155
    %s158 = sld [smem:[#allocation4 + $0x3]]
    %v159 = vstv %s158
    %v160 = vadd.f32 %v156, %v159
    %v161 = vadd.f32 %v157, %v159
    %s162 = scalar_lea.vmem %s3, 6
    %163 = vst [vmem:[%s162] sm:$0x3] %v160
    %164 = vst [vmem:[%s162 + $0x10] sm:$0x3] %v161
    %s165 = sld [smem:[#allocation2 + $0x200]]
    %v166 = vstv %s165
    %v167 = vmul.f32 %v39, %v166
    %v168 = vmul.f32 %v40, %v166
    %s169 = sld [smem:[#allocation2 + $0x201]]
    %v170 = vstv %s169
    %v171 = vmul.f32 %v42, %v170
    %v172 = vmul.f32 %v43, %v170
    %v173 = vadd.f32 %v167, %v171
    %v174 = vadd.f32 %v168, %v172
    %s175 = sld [smem:[#allocation2 + $0x202]]
    %v176 = vstv %s175
    %v177 = vmul.f32 %v45, %v176
    %v178 = vmul.f32 %v46, %v176
    %v179 = vadd.f32 %v173, %v177
    %v180 = vadd.f32 %v174, %v178
    %s181 = sld [smem:[#allocation2 + $0x203]]
    %v182 = vstv %s181
    %v183 = vmul.f32 %v48, %v182
    %v184 = vmul.f32 %v49, %v182
    %v185 = vadd.f32 %v179, %v183
    %v186 = vadd.f32 %v180, %v184
    %s187 = sld [smem:[#allocation4 + $0x4]]
    %v188 = vstv %s187
    %v189 = vadd.f32 %v185, %v188
    %v190 = vadd.f32 %v186, %v188
    %s191 = scalar_lea.vmem %s3, 8
    %192 = vst [vmem:[%s191] sm:$0x3] %v189
    %193 = vst [vmem:[%s191 + $0x10] sm:$0x3] %v190
    %s194 = sld [smem:[#allocation2 + $0x280]]
    %v195 = vstv %s194
    %v196 = vmul.f32 %v39, %v195
    %v197 = vmul.f32 %v40, %v195
    %s198 = sld [smem:[#allocation2 + $0x281]]
    %v199 = vstv %s198
    %v200 = vmul.f32 %v42, %v199
    %v201 = vmul.f32 %v43, %v199
    %v202 = vadd.f32 %v196, %v200
    %v203 = vadd.f32 %v197, %v201
    %s204 = sld [smem:[#allocation2 + $0x282]]
    %v205 = vstv %s204
    %v206 = vmul.f32 %v45, %v205
    %v207 = vmul.f32 %v46, %v205
    %v208 = vadd.f32 %v202, %v206
    %v209 = vadd.f32 %v203, %v207
    %s210 = sld [smem:[#allocation2 + $0x283]]
    %v211 = vstv %s210
    %v212 = vmul.f32 %v48, %v211
    %v213 = vmul.f32 %v49, %v211
    %v214 = vadd.f32 %v208, %v212
    %v215 = vadd.f32 %v209, %v213
    %s216 = sld [smem:[#allocation4 + $0x5]]
    %v217 = vstv %s216
    %v218 = vadd.f32 %v214, %v217
    %v219 = vadd.f32 %v215, %v217
    %s220 = scalar_lea.vmem %s3, 10
    %221 = vst [vmem:[%s220] sm:$0x3] %v218
    %222 = vst [vmem:[%s220 + $0x10] sm:$0x3] %v219
    %s223 = sld [smem:[#allocation2 + $0x300]]
    %v224 = vstv %s223
    %v225 = vmul.f32 %v39, %v224
    %v226 = vmul.f32 %v40, %v224
    %s227 = sld [smem:[#allocation2 + $0x301]]
    %v228 = vstv %s227
    %v229 = vmul.f32 %v42, %v228
    %v230 = vmul.f32 %v43, %v228
    %v231 = vadd.f32 %v225, %v229
    %v232 = vadd.f32 %v226, %v230
    %s233 = sld [smem:[#allocation2 + $0x302]]
    %v234 = vstv %s233
    %v235 = vmul.f32 %v45, %v234
    %v236 = vmul.f32 %v46, %v234
    %v237 = vadd.f32 %v231, %v235
    %v238 = vadd.f32 %v232, %v236
    %s239 = sld [smem:[#allocation2 + $0x303]]
    %v240 = vstv %s239
    %v241 = vmul.f32 %v48, %v240
    %v242 = vmul.f32 %v49, %v240
    %v243 = vadd.f32 %v237, %v241
    %v244 = vadd.f32 %v238, %v242
    %s245 = sld [smem:[#allocation4 + $0x6]]
    %v246 = vstv %s245
    %v247 = vadd.f32 %v243, %v246
    %v248 = vadd.f32 %v244, %v246
    %s249 = scalar_lea.vmem %s3, 12
    %250 = vst [vmem:[%s249] sm:$0x3] %v247
    %251 = vst [vmem:[%s249 + $0x10] sm:$0x3] %v248
    %s252 = sld [smem:[#allocation2 + $0x380]]
    %v253 = vstv %s252
    %v254 = vmul.f32 %v39, %v253
    %v255 = vmul.f32 %v40, %v253
    %s256 = sld [smem:[#allocation2 + $0x381]]
    %v257 = vstv %s256
    %v258 = vmul.f32 %v42, %v257
    %v259 = vmul.f32 %v43, %v257
    %v260 = vadd.f32 %v254, %v258
    %v261 = vadd.f32 %v255, %v259
    %s262 = sld [smem:[#allocation2 + $0x382]]
    %v263 = vstv %s262
    %v264 = vmul.f32 %v45, %v263
    %v265 = vmul.f32 %v46, %v263
    %v266 = vadd.f32 %v260, %v264
    %v267 = vadd.f32 %v261, %v265
    %s268 = sld [smem:[#allocation2 + $0x383]]
    %v269 = vstv %s268
    %v270 = vmul.f32 %v48, %v269
    %v271 = vmul.f32 %v49, %v269
    %v272 = vadd.f32 %v266, %v270
    %v273 = vadd.f32 %v267, %v271
    %s274 = sld [smem:[#allocation4 + $0x7]]
    %v275 = vstv %s274
    %v276 = vadd.f32 %v272, %v275
    %v277 = vadd.f32 %v273, %v275
    %s278 = scalar_lea.vmem %s3, 14
    %279 = vst [vmem:[%s278] sm:$0x3] %v276
    %280 = vst [vmem:[%s278 + $0x10] sm:$0x3] %v277
    // Predicated region
    $region22: #{linear_mapping_layer.1} parent=1 // pred_check
      _
    $region23: #{linear_mapping_layer.1} parent=1 // pred_check_branch
      %282 = sbr.rel (0) target = $region25
    $region24: #{linear_mapping_layer.1} parent=1 // pred_region
      _
    $region25: #{linear_mapping_layer.1} parent=1 // pred_fallthru
      _
    // Predicated region
    $region26: #{linear_mapping_layer.1} parent=1 // pred_check
      _
    $region27: #{linear_mapping_layer.1} parent=1 // pred_check_branch
      %284 = sbr.rel (0) target = $region29
    $region28: #{linear_mapping_layer.1} parent=1 // pred_region
      _
    $region29: #{linear_mapping_layer.1} parent=1 // pred_fallthru
      _
    %285 = vsyncpa [#allocation3], 1
    %286 = vsyncpa [#allocation5], 1

</llo_original>
